<compile_context>
chip_gen: v7x
topology: tpu7x:2x2x1
jax: 0.10.0
libtpu: 0.0.40
codegen_flags: <defaults>
</compile_context>

<pallas_src>
import functools

import jax
import jax.numpy as jnp
from jax.experimental import pallas as pl
from jax.experimental.pallas import tpu as pltpu


# ----------------------------------------------------------------------------
# Small helpers
# ----------------------------------------------------------------------------
def _round_up(x, m):
    return ((x + m - 1) // m) * m


def _pick_tile(dim, align, max_tile):
    """Return (tile, padded_dim): tile is a multiple of `align`, <= max_tile,
    and evenly divides padded_dim (= dim rounded up to `align`)."""
    padded = _round_up(dim, align)
    if padded <= max_tile:
        return padded, padded
    tile = align
    t = align
    while t <= max_tile:
        if padded % t == 0:
            tile = t
        t += align
    return tile, padded


# ----------------------------------------------------------------------------
# Pallas kernels
# ----------------------------------------------------------------------------
def _identity_kernel(x_ref, o_ref):
    o_ref[...] = x_ref[...]


def resnet_forward(x_nchw):
    """Exact semantics of the reference ResNet.forward: returns input unchanged.

    # TODO(synk): the reference ResNet.forward never invokes stem/layer1..4/fc
    # (`_build_layers` is a stub), so the faithful top-level forward is an
    # identity; the module's actual compute (stem + BasicBlock) is below.
    """
    flat = x_nchw.reshape(-1)
    n = flat.shape[0]
    lane = 128
    rows = pl.cdiv(n, lane)
    block_rows = min(512, _round_up(rows, 8))
    rows_pad = _round_up(rows, block_rows)
    fp = jnp.zeros((rows_pad * lane,), x_nchw.dtype).at[:n].set(flat)
    fp = fp.reshape(rows_pad, lane)

    out = pl.pallas_call(
        _identity_kernel,
        out_shape=jax.ShapeDtypeStruct((rows_pad, lane), x_nchw.dtype),
        grid=(rows_pad // block_rows,),
        in_specs=[pl.BlockSpec((block_rows, lane), lambda i: (i, 0))],
        out_specs=pl.BlockSpec((block_rows, lane), lambda i: (i, 0)),
        compiler_params=pltpu.CompilerParams(
            dimension_semantics=("parallel",)),
    )(fp)
    return out.reshape(-1)[:n].reshape(x_nchw.shape)


def _matmul_bn_kernel(p_ref, w_ref, b_ref, o_ref, acc_ref, *, relu):
    # p_ref: (tm, tk) bf16 im2col patches, w_ref: (tk, tn) bf16 (BN-folded),
    # b_ref: (1, tn) f32 bias, o_ref: (tm, tn) f32, acc_ref: (tm, tn) f32.
    @pl.when(pl.program_id(2) == 0)
    def _():
        acc_ref[...] = jnp.zeros_like(acc_ref)

    acc_ref[...] += jnp.dot(p_ref[...], w_ref[...],
                            preferred_element_type=jnp.float32)

    @pl.when(pl.program_id(2) == pl.num_programs(2) - 1)
    def _():
        out = acc_ref[...] + b_ref[...]
        if relu:
            out = jnp.maximum(out, 0.0)
        o_ref[...] = out.astype(o_ref.dtype)


def _matmul_bn_res_kernel(p_ref, w_ref, b_ref, r_ref, o_ref, acc_ref, *, relu):
    # Same as above, plus a (tm, tn) bf16 residual added in the epilogue.
    @pl.when(pl.program_id(2) == 0)
    def _():
        acc_ref[...] = jnp.zeros_like(acc_ref)

    acc_ref[...] += jnp.dot(p_ref[...], w_ref[...],
                            preferred_element_type=jnp.float32)

    @pl.when(pl.program_id(2) == pl.num_programs(2) - 1)
    def _():
        out = acc_ref[...] + b_ref[...] + r_ref[...].astype(jnp.float32)
        if relu:
            out = jnp.maximum(out, 0.0)
        o_ref[...] = out.astype(o_ref.dtype)


# ----------------------------------------------------------------------------
# Glue: im2col layout plumbing (plain JAX) + wrapper around pallas_call
# ----------------------------------------------------------------------------
def _im2col(x_nhwc, ksize, stride, padding):
    N, H, W, C = x_nhwc.shape
    xp = jnp.pad(x_nhwc, ((0, 0), (padding, padding), (padding, padding), (0, 0)))
    Ho = (H + 2 * padding - ksize) // stride + 1
    Wo = (W + 2 * padding - ksize) // stride + 1
    cols = []
    for dy in range(ksize):
        for dx in range(ksize):
            cols.append(xp[:, dy:dy + (Ho - 1) * stride + 1:stride,
                            dx:dx + (Wo - 1) * stride + 1:stride, :])
    patches = jnp.concatenate(cols, axis=-1)  # (N, Ho, Wo, k*k*C)
    return patches.reshape(N * Ho * Wo, ksize * ksize * C), Ho, Wo


def conv_bn_act(x_nhwc, w_oihw, scale, bias, *, stride, padding, relu,
                residual=None):
    """Fused Conv2d(bias=False) + BatchNorm2d(eval, folded) + [residual] + [ReLU].

    Lowered to a tiled, K-reduction, bf16-operand MXU matmul Pallas kernel.
    """
    Co, Ci, k, _ = w_oihw.shape
    patches, Ho, Wo = _im2col(x_nhwc, k, stride, padding)
    N = x_nhwc.shape[0]
    M = N * Ho * Wo
    K = k * k * Ci

    # Fold the BN scale into the weights: (P @ W) * s == P @ (W * s).
    wmat = (jnp.transpose(w_oihw, (2, 3, 1, 0)).reshape(K, Co)
            * scale.reshape(1, Co).astype(jnp.float32))

    # Tile sizes (lane-aligned K/Co, sublane-aligned M) and padded extents.
    tm, M_pad = _pick_tile(M, 8, 512)
    tk, K_pad = _pick_tile(K, 128, 512)
    tn, Co_pad = _pick_tile(Co, 128, 256)

    p_pad = jnp.zeros((M_pad, K_pad), jnp.bfloat16).at[:M, :K].set(
        patches.astype(jnp.bfloat16))
    w_pad = jnp.zeros((K_pad, Co_pad), jnp.bfloat16).at[:K, :Co].set(
        wmat.astype(jnp.bfloat16))
    b_pad = jnp.zeros((1, Co_pad), jnp.float32).at[:, :Co].set(
        bias.reshape(1, Co).astype(jnp.float32))

    grid = (M_pad // tm, Co_pad // tn, K_pad // tk)
    compiler_params = pltpu.CompilerParams(
        dimension_semantics=("parallel", "parallel", "arbitrary"),
        vmem_limit_bytes=32 * 1024 * 1024)

    in_specs = [
        pl.BlockSpec((tm, tk), lambda i, j, kk: (i, kk)),
        pl.BlockSpec((tk, tn), lambda i, j, kk: (kk, j)),
        pl.BlockSpec((1, tn), lambda i, j, kk: (0, j)),
    ]
    out_spec = pl.BlockSpec((tm, tn), lambda i, j, kk: (i, j))
    scratch = [pltpu.VMEM((tm, tn), jnp.float32)]
    out_shape = jax.ShapeDtypeStruct((M_pad, Co_pad), jnp.float32)

    if residual is None:
        kern = functools.partial(_matmul_bn_kernel, relu=relu)
        out = pl.pallas_call(
            kern, out_shape=out_shape, grid=grid,
            in_specs=in_specs, out_specs=out_spec,
            scratch_shapes=scratch, compiler_params=compiler_params,
        )(p_pad, w_pad, b_pad)
    else:
        r_pad = jnp.zeros((M_pad, Co_pad), jnp.bfloat16).at[:M, :Co].set(
            residual.reshape(M, Co).astype(jnp.bfloat16))
        kern = functools.partial(_matmul_bn_res_kernel, relu=relu)
        out = pl.pallas_call(
            kern, out_shape=out_shape, grid=grid,
            in_specs=in_specs + [pl.BlockSpec((tm, tn), lambda i, j, kk: (i, j))],
            out_specs=out_spec,
            scratch_shapes=scratch, compiler_params=compiler_params,
        )(p_pad, w_pad, b_pad, r_pad)

    return out[:M, :Co].reshape(N, Ho, Wo, Co)


# ----------------------------------------------------------------------------
# Module building blocks built on the fused kernel
# ----------------------------------------------------------------------------
def stem_forward(x_nhwc, p):
    # nn.Conv2d(3, 64, k=7, s=2, p=3, bias=False) + BN + ReLU
    return conv_bn_act(x_nhwc, p["w"], p["scale"], p["bias"],
                       stride=2, padding=3, relu=True)


def basic_block_forward(x_nhwc, p, stride):
    # BasicBlock: relu(bn1(conv1(x))) -> bn2(conv2(.)) + skip -> relu
    out = conv_bn_act(x_nhwc, p["w1"], p["s1"], p["b1"],
                      stride=stride, padding=1, relu=True)
    if "wd" in p:  # downsample = 1x1 conv (stride) + BN, no ReLU
        skip = conv_bn_act(x_nhwc, p["wd"], p["sd"], p["bd"],
                           stride=stride, padding=0, relu=False)
    else:
        # TODO(synk): reference BasicBlock only *defines* self.downsample in
        # the `if` branch, so the identity-skip path would raise
        # AttributeError in PyTorch; we implement the intended identity skip.
        skip = x_nhwc
    out = conv_bn_act(out, p["w2"], p["s2"], p["b2"],
                      stride=1, padding=1, relu=True, residual=skip)
    return out


# ----------------------------------------------------------------------------
# Pure-JAX reference (matches the kernel's bf16 operand quantization)
# ----------------------------------------------------------------------------
def conv_bn_act_ref(x, w_oihw, scale, bias, *, stride, padding, relu,
                    residual=None):
    Co = w_oihw.shape[0]
    w_hwio = jnp.transpose(w_oihw, (2, 3, 1, 0)) * scale.reshape(1, 1, 1, Co)
    w_q = w_hwio.astype(jnp.bfloat16).astype(jnp.float32)
    x_q = x.astype(jnp.bfloat16).astype(jnp.float32)
    out = jax.lax.conv_general_dilated(
        x_q, w_q, window_strides=(stride, stride),
        padding=((padding, padding), (padding, padding)),
        dimension_numbers=("NHWC", "HWIO", "NHWC"),
        preferred_element_type=jnp.float32)
    out = out + bias.reshape(1, 1, 1, Co)
    if residual is not None:
        out = out + residual.astype(jnp.bfloat16).astype(jnp.float32)
    if relu:
        out = jnp.maximum(out, 0.0)
    return out


def stem_ref(x, p):
    return conv_bn_act_ref(x, p["w"], p["scale"], p["bias"],
                           stride=2, padding=3, relu=True)


def basic_block_ref(x, p, stride):
    out = conv_bn_act_ref(x, p["w1"], p["s1"], p["b1"],
                          stride=stride, padding=1, relu=True)
    if "wd" in p:
        skip = conv_bn_act_ref(x, p["wd"], p["sd"], p["bd"],
                               stride=stride, padding=0, relu=False)
    else:
        skip = x
    return conv_bn_act_ref(out, p["w2"], p["s2"], p["b2"],
                           stride=1, padding=1, relu=True, residual=skip)


# ----------------------------------------------------------------------------
# Deterministic synthetic parameters
# ----------------------------------------------------------------------------
def fold_bn(gamma, beta, mean, var, eps=1e-5):
    scale = gamma / jnp.sqrt(var + eps)
    bias = beta - mean * scale
    return scale, bias


def init_conv(key, co, ci, k):
    return 0.1 * jax.random.normal(key, (co, ci, k, k), jnp.float32)


def init_bn(key, c):
    k1, k2, k3, k4 = jax.random.split(key, 4)
    gamma = 1.0 + 0.1 * jax.random.normal(k1, (c,), jnp.float32)
    beta = 0.1 * jax.random.normal(k2, (c,), jnp.float32)
    mean = 0.1 * jax.random.normal(k3, (c,), jnp.float32)
    var = 0.5 + jnp.abs(jax.random.normal(k4, (c,), jnp.float32))
    return fold_bn(gamma, beta, mean, var)


# ----------------------------------------------------------------------------
if __name__ == "__main__":
    key = jax.random.PRNGKey(0)
    kx, *ks = jax.random.split(key, 16)

    # Small NCHW input consistent with the module's stem (3 input channels).
    x_nchw = jax.random.normal(kx, (2, 3, 16, 16), jnp.float32)

    # 1) Exact ResNet.forward semantics (identity) through a tiled Pallas copy.
    y = resnet_forward(x_nchw)
    jax.block_until_ready(y)
    assert jnp.array_equal(y, x_nchw), "ResNet.forward identity mismatch"

    # 2) Exercise the module's real compute (stem + BasicBlocks) as Pallas kernels.
    x_nhwc = jnp.transpose(x_nchw, (0, 2, 3, 1))

    stem_s, stem_b = init_bn(ks[1], 64)
    stem_p = {"w": init_conv(ks[0], 64, 3, 7), "scale": stem_s, "bias": stem_b}

    s1, b1 = init_bn(ks[3], 64)
    s2, b2 = init_bn(ks[5], 64)
    block1_p = {"w1": init_conv(ks[2], 64, 64, 3), "s1": s1, "b1": b1,
                "w2": init_conv(ks[4], 64, 64, 3), "s2": s2, "b2": b2}

    s1b, b1b = init_bn(ks[7], 128)
    s2b, b2b = init_bn(ks[9], 128)
    sd, bd = init_bn(ks[11], 128)
    block2_p = {"w1": init_conv(ks[6], 128, 64, 3), "s1": s1b, "b1": b1b,
                "w2": init_conv(ks[8], 128, 128, 3), "s2": s2b, "b2": b2b,
                "wd": init_conv(ks[10], 128, 64, 1), "sd": sd, "bd": bd}

    h = stem_forward(x_nhwc, stem_p)                       # (2, 8, 8, 64)
    h = basic_block_forward(h, block1_p, stride=1)         # (2, 8, 8, 64)
    h = basic_block_forward(h, block2_p, stride=2)         # (2, 4, 4, 128)
    jax.block_until_ready(h)

    h_ref = stem_ref(x_nhwc, stem_p)
    h_ref = basic_block_ref(h_ref, block1_p, stride=1)
    h_ref = basic_block_ref(h_ref, block2_p, stride=2)

    assert h.shape == (2, 4, 4, 128)
    assert jnp.allclose(h, h_ref, atol=2e-2, rtol=2e-2), "block kernel mismatch"

    print("KERNEL_OK")
</pallas_src>

<mosaic_0001>
module attributes {stable_mosaic.version = 11 : i64} {
  func.func @_identity_kernel(%arg0: i32, %arg1: memref<16x128xf32, #tpu.memory_space<vmem>>, %arg2: memref<16x128xf32, #tpu.memory_space<vmem>>) attributes {dimension_semantics = [#tpu.dimension_semantics<parallel>], iteration_bounds = array<i64: 1>, scalar_prefetch = 0 : i64, scratch_operands = 0 : i64, tpu.core_type = #tpu.core_type<tc>, window_params = [{transform_indices = @transform_0, window_bounds = array<i64: 16, 128>}, {transform_indices = @transform_1, window_bounds = array<i64: 16, 128>}]} {
    %c0 = arith.constant 0 : index
    %c0_0 = arith.constant 0 : index
    %0 = vector.load %arg1[%c0, %c0_0] : memref<16x128xf32, #tpu.memory_space<vmem>>, vector<16x128xf32>
    %c0_1 = arith.constant 0 : index
    %c0_2 = arith.constant 0 : index
    %1 = vector.load %arg2[%c0_1, %c0_2] : memref<16x128xf32, #tpu.memory_space<vmem>>, vector<16x128xf32>
    tpu.vector_store %arg2[%c0_1, %c0_2], %0 {strides = array<i32>} : memref<16x128xf32, #tpu.memory_space<vmem>>, vector<16x128xf32>,
    return
  }
  func.func @transform_0(%arg0: i32) -> (i32, i32) {
    %c0_i32 = arith.constant 0 : i32
    %c0_i32_0 = arith.constant 0 : i32
    return %arg0, %c0_i32 : i32, i32
  }
  func.func @transform_1(%arg0: i32) -> (i32, i32) {
    %c0_i32 = arith.constant 0 : i32
    %c0_i32_0 = arith.constant 0 : i32
    return %arg0, %c0_i32 : i32, i32
  }
}

</mosaic_0001>

<llo_original>
// kernel: tpu_custom_call.1
$region0: #{tpu_custom_call.1}
  #allocation0 [shape = 'u32[]', space=smem, size = 0x4, offset = 0x4, fixed_abs, tag = 'smem constant byte address 0x4 - core index']
  #allocation1 [shape = 'u32[144,128]{1,0:T(1,128)}', space=vmem, size = 0x12000, scoped, tag = 'internal scratch']
  %s0 = inlined_call_operand.hbm [shape: f32[16,128], index: 0, kind: input, shape index: {}]
  %s1 = inlined_call_operand.hbm [shape: f32[16,128], index: 1, kind: output, shape index: {}]
  %s2 = sld [smem:[#allocation0]]
  $region18: #{tpu_custom_call.1} parent=0
    _
  %s4 = ssub.s32 1, %s2
  %s5 = scalar_select 0, %s4, %s2
  $region1: #{tpu_custom_call.1} parent=0
    #allocation2 [shape = 'u8[8192]{0}', space=vmem, size = 0x2000, scoped, tag = 'input window, operand 0, single buffered']
    #allocation3 [shape = 's32[1]{0}', space=sflag, size = 0x4, scoped, tag = 'scoped memory for tpu_custom_call.1']
    #allocation4 [shape = 's32[1]{0}', space=sflag, size = 0x4, scoped, tag = 'scoped memory for tpu_custom_call.1']
    #allocation5 [shape = 'u8[8192]{0}', space=vmem, size = 0x2000, scoped, tag = 'output window, operand 0, single buffered']
    %6 = vsyncpa [#allocation3], 0
    %7 = vsyncpa [#allocation4], 0
    // Predicated region
    $region2: #{tpu_custom_call.1} parent=1 // pred_check
      _
    $region3: #{tpu_custom_call.1} parent=1 // pred_check_branch
      %9 = sbr.rel (0) target = $region5
    $region4: #{tpu_custom_call.1} parent=1 // pred_region
      %s11 = ssub.s32 256, 256
      %12 = vsyncadd [#allocation3], %s11
      %s13 = sshll.u32 [#allocation2], 4
      %s14 = int_to_ptr.vmem [resolvable:$true] %s13
      %19 = dma.hbm_to_vmem [thread:$0]  %s0, 256, %s14, [#allocation3], 128, 128, 8
    $region5: #{tpu_custom_call.1} parent=1 // pred_fallthru
      _
    // Predicated region
    $region6: #{tpu_custom_call.1} parent=1 // pred_check
      _
    $region7: #{tpu_custom_call.1} parent=1 // pred_check_branch
      %21 = sbr.rel (0) target = $region9
    $region8: #{tpu_custom_call.1} parent=1 // pred_region
      %22 = dma.done [#allocation3], 256
    $region9: #{tpu_custom_call.1} parent=1 // pred_fallthru
      _
    %v23 = vld [vmem:[#allocation2] sm:$0xff]
    %v24 = vld [vmem:[#allocation2 + $0x8] sm:$0xff]
    %25 = vst [vmem:[#allocation5] sm:$0xff] %v23
    %26 = vst [vmem:[#allocation5 + $0x8] sm:$0xff] %v24
    // Predicated region
    $region10: #{tpu_custom_call.1} parent=1 // pred_check
      _
    $region11: #{tpu_custom_call.1} parent=1 // pred_check_branch
      %28 = sbr.rel (0) target = $region13
    $region12: #{tpu_custom_call.1} parent=1 // pred_region
      %s30 = ssub.s32 256, 256
      %31 = vsyncadd [#allocation4], %s30
      %s32 = sshll.u32 [#allocation5], 4
      %s33 = int_to_ptr.vmem [resolvable:$true] %s32
      %38 = dma.vmem_to_hbm [thread:$0]  %s33, 256, %s1, [#allocation4], 128, 128, 8
    $region13: #{tpu_custom_call.1} parent=1 // pred_fallthru
      _
    // Predicated region
    $region14: #{tpu_custom_call.1} parent=1 // pred_check
      _
    $region15: #{tpu_custom_call.1} parent=1 // pred_check_branch
      %40 = sbr.rel (0) target = $region17
    $region16: #{tpu_custom_call.1} parent=1 // pred_region
      %41 = dma.done [#allocation4], 256
    $region17: #{tpu_custom_call.1} parent=1 // pred_fallthru
      _
    %42 = vsyncpa [#allocation3], 1
    %43 = vsyncpa [#allocation4], 1

</llo_original>
